<compile_context>
chip_gen: v7x
topology: tpu7x:2x2x1
jax: 0.10.0
libtpu: 0.0.40
codegen_flags: <defaults>
</compile_context>

<pallas_src>
import functools

import jax
import jax.numpy as jnp
from jax.experimental import pallas as pl
from jax.experimental.pallas import tpu as pltpu

_NEG_LARGE = -1e30


def _topk_slabs(work, k, axis):
    """k largest values along `axis` (each as a keepdims slab), exact under ties."""
    slabs = []
    for t in range(k):
        m = jnp.max(work, axis=axis, keepdims=True)
        slabs.append(m)
        if t + 1 < k:
            # Mask out exactly one occurrence of the current max so duplicates
            # are still counted the same way torch.topk / lax.top_k count them.
            idx = jnp.argmax(work, axis=axis, keepdims=True)
            iota = jax.lax.broadcasted_iota(jnp.int32, work.shape, axis)
            work = jnp.where(iota == idx, _NEG_LARGE, work)
    return slabs


def _topk_sum(work, k, axis):
    slabs = _topk_slabs(work, k, axis)
    total = jnp.sum(slabs[0])
    for m in slabs[1:]:
        total = total + jnp.sum(m)
    return total


def _contrastive_kernel(*refs, margin, max_violation, need_i2t, need_t2i,
                        topk, average_batch, threshold_pos, batch, row_tile,
                        has_rel, use_topk_scratch):
    scores_ref, dcol_ref, drow_ref = refs[0], refs[1], refs[2]
    pos = 3
    rel_ref = None
    if has_rel:
        rel_ref = refs[pos]
        pos += 1
    out_ref = refs[pos]
    pos += 1
    topk_scr = refs[pos] if use_topk_scratch else None

    B = batch
    TR = row_tile
    k = topk
    r = pl.program_id(0)
    n_tiles = pl.num_programs(0)

    s = scores_ref[...].astype(jnp.float32)            # (TR, B), cast on-chip

    # Diagonal / relevance mask for this row tile.
    row_l = jax.lax.broadcasted_iota(jnp.int32, (TR, B), 0)
    col_i = jax.lax.broadcasted_iota(jnp.int32, (TR, B), 1)
    zero_mask = (row_l + r * TR) == col_i
    if has_rel:
        rel = rel_ref[...].astype(jnp.float32)
        zero_mask = zero_mask | (rel >= threshold_pos)

    # Fold the mask into `base` once: masked entries become very negative so
    # both hinge costs clamp to exactly 0 there (shared by i2t and t2i).
    base = jnp.where(zero_mask, _NEG_LARGE, s + margin)

    @pl.when(r == 0)
    def _init_out():
        out_ref[...] = jnp.zeros_like(out_ref)

    if use_topk_scratch:
        @pl.when(r == 0)
        def _init_scratch():
            topk_scr[...] = jnp.full(topk_scr.shape, _NEG_LARGE, jnp.float32)

    partial = jnp.zeros((), jnp.float32)

    if need_i2t:
        # cost_s[i, j] = max(0, margin + s[i, j] - s[i, i])  (masked entries -> 0)
        d_col = dcol_ref[...]                            # (TR, 1) f32
        cost_s = jnp.maximum(base - d_col, 0.0)
        if max_violation:
            # top-k along axis=1 is local to each row, so it is exact per tile.
            p = _topk_sum(cost_s, k, axis=1) / float(k)
            if average_batch:
                p = p / float(B)
        else:
            p = jnp.sum(cost_s)
            if average_batch:
                p = p / float(B * (B - 1))
        partial = partial + p

    if need_t2i:
        # cost_im[i, j] = max(0, margin + s[i, j] - s[j, j])  (masked entries -> 0)
        d_row = drow_ref[...]                            # (1, B) f32
        cost_im = jnp.maximum(base - d_row, 0.0)
        if max_violation:
            if use_topk_scratch:
                # Columns span row tiles: merge this tile into the running
                # per-column top-k scratch; sum it at the final grid step.
                combined = jnp.concatenate([topk_scr[...], cost_im], axis=0)
                slabs = _topk_slabs(combined, k, axis=0)
                topk_scr[...] = (jnp.concatenate(slabs, axis=0)
                                 if k > 1 else slabs[0])
            else:
                p = _topk_sum(cost_im, k, axis=0) / float(k)
                if average_batch:
                    p = p / float(B)
                partial = partial + p
        else:
            p = jnp.sum(cost_im)
            if average_batch:
                p = p / float(B * (B - 1))
            partial = partial + p

    out_ref[...] = out_ref[...] + jnp.reshape(partial, (1, 1))

    if use_topk_scratch:
        @pl.when(r == n_tiles - 1)
        def _finalize():
            t = jnp.sum(topk_scr[...]) / float(k)
            if average_batch:
                t = t / float(B)
            out_ref[...] = out_ref[...] + jnp.reshape(t, (1, 1))


def _pick_row_tile(batch, itemsize):
    """Row-tile height: full batch if the (B, B) block is small, otherwise the
    largest aligned divisor of B keeping a (TR, B) scores block around ~2 MiB."""
    align = max(8, 32 // max(1, itemsize))       # f32: 8, bf16: 16, int8/fp8: 32
    budget = 2 * 1024 * 1024                     # bytes per scores block
    max_tr = max(align, budget // max(1, batch * itemsize))
    if batch <= max_tr:
        return batch
    tr = (min(max_tr, batch) // align) * align
    while tr >= align:
        if batch % tr == 0:
            return tr
        tr -= align
    return batch   # no aligned divisor: fall back to a single (B, B) block


def contrastive_loss(scores, *, margin=0.0, max_violation=False, direction='bi',
                     topk=1, average_batch=True, batch_relevance=None,
                     threshold_pos=1.0, row_tile=None):
    """Pallas implementation of ContrastiveLoss.forward. Returns a scalar f32."""
    if direction not in ('i2t', 't2i', 'bi'):
        raise ValueError(f"unknown direction: {direction}")
    B = scores.shape[0]
    need_i2t = direction in ('i2t', 'bi')
    need_t2i = direction in ('t2i', 'bi')
    has_rel = batch_relevance is not None
    k = int(min(B, topk))

    itemsize = scores.dtype.itemsize
    align = max(8, 32 // max(1, itemsize))
    if row_tile is not None and row_tile != B and (B % row_tile or row_tile % align):
        row_tile = None                              # invalid override -> auto
    TR = row_tile if row_tile is not None else _pick_row_tile(B, itemsize)
    n_tiles = B // TR
    use_topk_scratch = bool(max_violation and need_t2i and n_tiles > 1)

    # Precompute the diagonal once on the host side (O(B) bytes of extra DMA
    # instead of two full-matrix in-kernel reductions, and required for tiling).
    diag = jnp.diagonal(scores).astype(jnp.float32)
    d_col = diag.reshape(B, 1)                       # s[i, i] sliced per row tile
    d_row = diag.reshape(1, B)                       # s[j, j] for every column

    inputs = [scores, d_col, d_row]
    in_specs = [
        pl.BlockSpec((TR, B), lambda r: (r, 0)),     # scores row tile (native dtype)
        pl.BlockSpec((TR, 1), lambda r: (r, 0)),     # diagonal slice for this tile
        pl.BlockSpec((1, B), lambda r: (0, 0)),      # full diagonal (columns)
    ]
    if has_rel:
        inputs.append(batch_relevance)
        in_specs.append(pl.BlockSpec((TR, B), lambda r: (r, 0)))

    scratch_shapes = []
    if use_topk_scratch:
        scratch_shapes.append(pltpu.VMEM((k, B), jnp.float32))

    kernel = functools.partial(
        _contrastive_kernel,
        margin=float(margin),
        max_violation=bool(max_violation),
        need_i2t=need_i2t,
        need_t2i=need_t2i,
        topk=k,
        average_batch=bool(average_batch),
        threshold_pos=float(threshold_pos),
        batch=B,
        row_tile=TR,
        has_rel=has_rel,
        use_topk_scratch=use_topk_scratch,
    )

    out = pl.pallas_call(
        kernel,
        out_shape=jax.ShapeDtypeStruct((1, 1), jnp.float32),
        grid=(n_tiles,),
        in_specs=in_specs,
        out_specs=pl.BlockSpec((1, 1), lambda r: (0, 0)),
        scratch_shapes=scratch_shapes,
        compiler_params=pltpu.CompilerParams(
            dimension_semantics=("arbitrary",)),      # grid axis is a reduction
    )(*inputs)
    return out[0, 0]


def _ref_loss(scores, *, margin=0.0, max_violation=False, direction='bi',
              topk=1, average_batch=True, batch_relevance=None,
              threshold_pos=1.0):
    """Pure-JAX reference mirroring the PyTorch module (incl. relevance mask)."""
    B = scores.shape[0]
    scores = scores.astype(jnp.float32)
    diag = jnp.diag(scores)
    mask = jnp.eye(B, dtype=bool)
    if batch_relevance is not None:
        mask = mask | (batch_relevance.astype(jnp.float32) >= threshold_pos)
    k = min(B, topk)

    def reduce_cost(cost, axis):
        if max_violation:
            vals = jax.lax.top_k(jnp.swapaxes(cost, axis, -1), k)[0]
            total = jnp.sum(vals) / k
            if average_batch:
                total = total / B
        else:
            total = jnp.sum(cost)
            if average_batch:
                total = total / (B * (B - 1))
        return total

    total = jnp.zeros((), jnp.float32)
    if direction in ('i2t', 'bi'):
        cost_s = jnp.clip(margin + scores - diag[:, None], 0.0, None)
        cost_s = jnp.where(mask, 0.0, cost_s)
        total = total + reduce_cost(cost_s, axis=1)
    if direction in ('t2i', 'bi'):
        cost_im = jnp.clip(margin + scores - diag[None, :], 0.0, None)
        cost_im = jnp.where(mask, 0.0, cost_im)
        total = total + reduce_cost(cost_im, axis=0)
    return total


if __name__ == "__main__":
    key = jax.random.PRNGKey(0)
    k1, k2, k3 = jax.random.split(key, 3)

    # Small single-tile batch.
    B1 = 8
    scores8 = jax.random.normal(k1, (B1, B1), dtype=jnp.float32)
    rel8 = jax.random.uniform(k2, (B1, B1), dtype=jnp.float32) * 2.0  # some >= 1.0

    # Slightly larger batch, forced into two row tiles to exercise the
    # accumulating grid and the running-top-k scratch merge.
    B2 = 16
    scores16 = jax.random.normal(k3, (B2, B2), dtype=jnp.float32)
    scores16_bf16 = scores16.astype(jnp.bfloat16)      # native-dtype pass-through

    cases = [
        (scores8, None, dict(margin=0.2, max_violation=False, direction='bi', topk=1), {}),
        (scores8, None, dict(margin=0.2, max_violation=True, direction='bi', topk=1), {}),
        (scores8, None, dict(margin=0.1, max_violation=False, direction='i2t', topk=1), {}),
        (scores8, None, dict(margin=0.1, max_violation=True, direction='t2i', topk=2), {}),
        (scores8, rel8, dict(margin=0.2, max_violation=True, direction='bi', topk=2), {}),
        (scores16, None, dict(margin=0.2, max_violation=False, direction='bi', topk=1),
         dict(row_tile=8)),
        (scores16, None, dict(margin=0.2, max_violation=True, direction='bi', topk=2),
         dict(row_tile=8)),
        (scores16_bf16, None, dict(margin=0.2, max_violation=True, direction='bi', topk=1), {}),
    ]

    for scores, rel, cfg, extra in cases:
        got = contrastive_loss(scores, batch_relevance=rel, **cfg, **extra)
        want = _ref_loss(scores, batch_relevance=rel, **cfg)
        got = jax.block_until_ready(got)
        assert jnp.allclose(got, want, atol=2e-5, rtol=2e-5), (cfg, extra, got, want)

    print("KERNEL_OK")
</pallas_src>

<mosaic_0001>
module attributes {stable_mosaic.version = 11 : i64} {
  func.func @_contrastive_kernel(%arg0: i32, %arg1: memref<8x8xf32, #tpu.memory_space<vmem>>, %arg2: memref<8x1xf32, #tpu.memory_space<vmem>>, %arg3: memref<1x8xf32, #tpu.memory_space<vmem>>, %arg4: memref<1x1xf32, #tpu.memory_space<vmem>>) attributes {dimension_semantics = [#tpu.dimension_semantics<arbitrary>], iteration_bounds = array<i64: 1>, scalar_prefetch = 0 : i64, scratch_operands = 0 : i64, tpu.core_type = #tpu.core_type<tc>, window_params = [{transform_indices = @transform_0, window_bounds = array<i64: 8, 8>}, {transform_indices = @transform_1, window_bounds = array<i64: 8, 1>}, {pipeline_mode = #tpu.pipeline_mode<synchronous>, transform_indices = @transform_2, window_bounds = array<i64: 1, 8>}, {pipeline_mode = #tpu.pipeline_mode<synchronous>, transform_indices = @transform_3, window_bounds = array<i64: 1, 1>}]} {
    %c0 = arith.constant 0 : index
    %c0_0 = arith.constant 0 : index
    %0 = vector.load %arg1[%c0, %c0_0] : memref<8x8xf32, #tpu.memory_space<vmem>>, vector<8x8xf32>
    %1 = tpu.iota {dimensions = array<i32: 0>} : vector<8x8xi32>
    %2 = tpu.iota {dimensions = array<i32: 1>} : vector<8x8xi32>
    %c8_i32 = arith.constant 8 : i32
    %3 = arith.muli %arg0, %c8_i32 : i32
    %4 = vector.broadcast %3 : i32 to vector<8x8xi32>
    %5 = arith.addi %1, %4 : vector<8x8xi32>
    %6 = arith.cmpi eq, %5, %2 : vector<8x8xi32>
    %cst = arith.constant 2.000000e-01 : f32
    %7 = vector.broadcast %cst : f32 to vector<8x8xf32>
    %8 = arith.addf %0, %7 : vector<8x8xf32>
    %cst_1 = arith.constant -1.000000e+30 : f32
    %9 = vector.broadcast %cst_1 : f32 to vector<8x8xf32>
    %10 = arith.select %6, %9, %8 : vector<8x8xi1>, vector<8x8xf32>
    %c0_i32 = arith.constant 0 : i32
    %11 = arith.cmpi eq, %arg0, %c0_i32 : i32
    %12 = arith.extui %11 : i1 to i32
    %c0_i32_2 = arith.constant 0 : i32
    %13 = arith.cmpi ne, %12, %c0_i32_2 : i32
    scf.if %13 {
      %cst_18 = arith.constant 0.000000e+00 : f32
      %40 = vector.broadcast %cst_18 : f32 to vector<1x1xf32>
      %c0_19 = arith.constant 0 : index
      %c0_20 = arith.constant 0 : index
      %41 = vector.load %arg4[%c0_19, %c0_20] : memref<1x1xf32, #tpu.memory_space<vmem>>, vector<1x1xf32>
      tpu.vector_store %arg4[%c0_19, %c0_20], %40 {strides = array<i32>} : memref<1x1xf32, #tpu.memory_space<vmem>>, vector<1x1xf32>,
    } else {
    }
    %c0_3 = arith.constant 0 : index
    %c0_4 = arith.constant 0 : index
    %14 = vector.load %arg2[%c0_3, %c0_4] : memref<8x1xf32, #tpu.memory_space<vmem>>, vector<8x1xf32>
    %15 = vector.broadcast %14 : vector<8x1xf32> to vector<8x8xf32>
    %16 = arith.subf %10, %15 : vector<8x8xf32>
    %cst_5 = arith.constant 0.000000e+00 : f32
    %17 = vector.broadcast %cst_5 : f32 to vector<8x8xf32>
    %18 = arith.maximumf %16, %17 : vector<8x8xf32>
    %19 = vector.shape_cast %18 : vector<8x8xf32> to vector<1x8x8xf32>
    %cst_6 = arith.constant dense<0.000000e+00> : vector<1xf32>
    %20 = vector.multi_reduction <add>, %19, %cst_6 [1, 2] : vector<1x8x8xf32> to vector<1xf32>
    %21 = vector.shape_cast %20 : vector<1xf32> to vector<1x1x1xf32>
    %22 = vector.extract %21[0, 0, 0] : f32 from vector<1x1x1xf32>
    %cst_7 = arith.constant 5.600000e+01 : f32
    %23 = arith.divf %22, %cst_7 : f32
    %cst_8 = arith.constant 0.000000e+00 : f32
    %24 = arith.addf %cst_8, %23 : f32
    %c0_9 = arith.constant 0 : index
    %c0_10 = arith.constant 0 : index
    %25 = vector.load %arg3[%c0_9, %c0_10] : memref<1x8xf32, #tpu.memory_space<vmem>>, vector<1x8xf32>
    %26 = vector.broadcast %25 : vector<1x8xf32> to vector<8x8xf32>
    %27 = arith.subf %10, %26 : vector<8x8xf32>
    %cst_11 = arith.constant 0.000000e+00 : f32
    %28 = vector.broadcast %cst_11 : f32 to vector<8x8xf32>
    %29 = arith.maximumf %27, %28 : vector<8x8xf32>
    %30 = vector.shape_cast %29 : vector<8x8xf32> to vector<1x8x8xf32>
    %cst_12 = arith.constant dense<0.000000e+00> : vector<1xf32>
    %31 = vector.multi_reduction <add>, %30, %cst_12 [1, 2] : vector<1x8x8xf32> to vector<1xf32>
    %32 = vector.shape_cast %31 : vector<1xf32> to vector<1x1x1xf32>
    %33 = vector.extract %32[0, 0, 0] : f32 from vector<1x1x1xf32>
    %cst_13 = arith.constant 5.600000e+01 : f32
    %34 = arith.divf %33, %cst_13 : f32
    %35 = arith.addf %24, %34 : f32
    %c0_14 = arith.constant 0 : index
    %c0_15 = arith.constant 0 : index
    %36 = vector.load %arg4[%c0_14, %c0_15] : memref<1x1xf32, #tpu.memory_space<vmem>>, vector<1x1xf32>
    %37 = vector.broadcast %35 : f32 to vector<1x1xf32>
    %38 = arith.addf %36, %37 : vector<1x1xf32>
    %c0_16 = arith.constant 0 : index
    %c0_17 = arith.constant 0 : index
    %39 = vector.load %arg4[%c0_16, %c0_17] : memref<1x1xf32, #tpu.memory_space<vmem>>, vector<1x1xf32>
    tpu.vector_store %arg4[%c0_16, %c0_17], %38 {strides = array<i32>} : memref<1x1xf32, #tpu.memory_space<vmem>>, vector<1x1xf32>,
    return
  }
  func.func @transform_0(%arg0: i32) -> (i32, i32) {
    %c0_i32 = arith.constant 0 : i32
    %c0_i32_0 = arith.constant 0 : i32
    return %arg0, %c0_i32 : i32, i32
  }
  func.func @transform_1(%arg0: i32) -> (i32, i32) {
    %c0_i32 = arith.constant 0 : i32
    %c0_i32_0 = arith.constant 0 : i32
    return %arg0, %c0_i32 : i32, i32
  }
  func.func @transform_2(%arg0: i32) -> (i32, i32) {
    %c0_i32 = arith.constant 0 : i32
    %c0_i32_0 = arith.constant 0 : i32
    %c0_i32_1 = arith.constant 0 : i32
    return %c0_i32, %c0_i32_0 : i32, i32
  }
  func.func @transform_3(%arg0: i32) -> (i32, i32) {
    %c0_i32 = arith.constant 0 : i32
    %c0_i32_0 = arith.constant 0 : i32
    %c0_i32_1 = arith.constant 0 : i32
    return %c0_i32, %c0_i32_0 : i32, i32
  }
}

</mosaic_0001>

<llo_original>
// kernel: tpu_custom_call.1
$region0: #{tpu_custom_call.1}
  #allocation0 [shape = 'u32[]', space=smem, size = 0x4, offset = 0x4, fixed_abs, tag = 'smem constant byte address 0x4 - core index']
  #allocation1 [shape = 'u32[144,128]{1,0:T(1,128)}', space=vmem, size = 0x12000, scoped, tag = 'internal scratch']
  %s0 = inlined_call_operand.vmem [shape: f32[8,8], index: 0, kind: input, shape index: {}]
  %s1 = inlined_call_operand.vmem [shape: f32[8,1], index: 1, kind: input, shape index: {}]
  %s2 = inlined_call_operand.vmem [shape: f32[1,8], index: 2, kind: input, shape index: {}]
  %s3 = inlined_call_operand.hbm [shape: f32[1,1], index: 3, kind: output, shape index: {}]
  %s4 = sld [smem:[#allocation0]]
  $region26: #{tpu_custom_call.1} parent=0
    _
  %s6 = ssub.s32 1, %s4
  %s7 = scalar_select 0, %s6, %s4
  $region1: #{tpu_custom_call.1} parent=0
    #allocation2 [shape = 'u8[512]{0}', space=vmem, size = 0x400, scoped, tag = 'output window, operand 0, single buffered']
    #allocation3 [shape = 's32[1]{0}', space=sflag, size = 0x4, scoped, tag = 'scoped memory for tpu_custom_call.1']
    %8 = vsyncpa [#allocation3], 0
    // Predicated region
    $region2: #{tpu_custom_call.1} parent=1 // pred_check
      _
    $region3: #{tpu_custom_call.1} parent=1 // pred_check_branch
      %10 = sbr.rel (0) target = $region5
    $region4: #{tpu_custom_call.1} parent=1 // pred_region
      _
    $region5: #{tpu_custom_call.1} parent=1 // pred_fallthru
      _
    // Predicated region
    $region6: #{tpu_custom_call.1} parent=1 // pred_check
      _
    $region7: #{tpu_custom_call.1} parent=1 // pred_check_branch
      %12 = sbr.rel (0) target = $region9
    $region8: #{tpu_custom_call.1} parent=1 // pred_region
      _
    $region9: #{tpu_custom_call.1} parent=1 // pred_fallthru
      _
    // Predicated region
    $region10: #{tpu_custom_call.1} parent=1 // pred_check
      _
    $region11: #{tpu_custom_call.1} parent=1 // pred_check_branch
      %14 = sbr.rel (0) target = $region13
    $region12: #{tpu_custom_call.1} parent=1 // pred_region
      _
    $region13: #{tpu_custom_call.1} parent=1 // pred_fallthru
      _
    %v15 = vld [vmem:[%s0] sm:$0xff]
    %v16 = vlaneseq
    %v17 = vshrl.u32 %v16, 7
    %v18 = vlaneseq
    %v19 = vand.u32 %v18, 127
    %s20 = smul.u32 0, 8
    %v21 = vstv %s20
    %v22 = vadd.s32 %v17, %v21
    %vm23 = vcmp.eq.s32.totalorder %v22, %v19
    %v24 = vadd.f32 %v15, 0.2
    %v25 = vsel %vm23, -1e+30, %v24
    %p26 = scmp.eq.s32.totalorder 0, 0
    // Predicated region
    $region14: #{tpu_custom_call.1} parent=1 // pred_check
      %p27 = pneg %p26
    $region15: #{tpu_custom_call.1} parent=1 // pred_check_branch
      %29 = sbr.rel (%p27) target = $region17
    $region16: #{tpu_custom_call.1} parent=1 // pred_region
      %vm30 = vcmask 0
      %31 = vst.msk [vmem:[#allocation2] sm:$0x1] %vm30, 0.0
    $region17: #{tpu_custom_call.1} parent=1 // pred_fallthru
      _
    %v32 = vld [vmem:[%s1] sm:$0xff]
    %34 = vset.pattern.permute.xlu0 0
    %35 = vperm.xlu0 %34, %v32
    %v36 = vpop.permute.xlu0 %35
    %v38 = vsub.f32 %v25, %v36
    %v39 = vmax.f32 %v38, 0.0
    %vm40 = vcmask 64512
    %v41 = vsel %vm40, %v39, 0.0
    %42 = vadd.xlane.f32.xlu0 %v41
    %v43 = vpop.xlane.xlu0 %42
    %v44 = vrot.slane %v43, 4
    %v45 = vadd.f32 %v43, %v44
    %v46 = vrot.slane %v45, 2
    %v47 = vadd.f32 %v45, %v46
    %v48 = vrot.slane %v47, 1
    %v49 = vadd.f32 %v47, %v48
    %s50 = vtos %v49
    %v51 = vrcp.pop 56.0
    %s52 = vtos %v51
    %s53 = smul.f32 %s50, %s52
    %s54 = sadd.f32 %s53, 0.0
    %v55 = vld [vmem:[%s2] sm:$0x1]
    %v57 = vlaneseq
    %v58 = vshrl.u32 %v57, 7
    %v59 = vsub.s32 0, %v58
    %v60 = vrot.slane %v55, %v59
    %v62 = vsub.f32 %v25, %v60
    %v63 = vmax.f32 %v62, 0.0
    %v64 = vsel %vm40, %v63, 0.0
    %65 = vadd.xlane.f32.xlu0 %v64
    %v66 = vpop.xlane.xlu0 %65
    %v67 = vrot.slane %v66, 4
    %v68 = vadd.f32 %v66, %v67
    %v69 = vrot.slane %v68, 2
    %v70 = vadd.f32 %v68, %v69
    %v71 = vrot.slane %v70, 1
    %v72 = vadd.f32 %v70, %v71
    %s73 = vtos %v72
    %v74 = vrcp.pop 56.0
    %s75 = vtos %v74
    %s76 = smul.f32 %s73, %s75
    %s77 = sadd.f32 %s54, %s76
    %v78 = vld [vmem:[#allocation2] sm:$0x1]
    %v79 = vstv %s77
    %v80 = vadd.f32 %v78, %v79
    %vm81 = vcmask 0
    %82 = vst.msk [vmem:[#allocation2] sm:$0x1] %vm81, %v80
    // Predicated region
    $region18: #{tpu_custom_call.1} parent=1 // pred_check
      _
    $region19: #{tpu_custom_call.1} parent=1 // pred_check_branch
      %84 = sbr.rel (0) target = $region21
    $region20: #{tpu_custom_call.1} parent=1 // pred_region
      %s86 = ssub.s32 16, 16
      %87 = vsyncadd [#allocation3], %s86
      %s89 = sshll.u32 [#allocation2], 4
      %s90 = int_to_ptr.vmem [resolvable:$true] %s89
      %92 = dma.vmem_to_hbm [thread:$0]  %s90, 16, %s3, [#allocation3]
    $region21: #{tpu_custom_call.1} parent=1 // pred_fallthru
      _
    // Predicated region
    $region22: #{tpu_custom_call.1} parent=1 // pred_check
      _
    $region23: #{tpu_custom_call.1} parent=1 // pred_check_branch
      %94 = sbr.rel (0) target = $region25
    $region24: #{tpu_custom_call.1} parent=1 // pred_region
      %95 = dma.done [#allocation3], 16
    $region25: #{tpu_custom_call.1} parent=1 // pred_fallthru
      _
    %96 = vsyncpa [#allocation3], 1

</llo_original>
